<compile_context>
chip_gen: v7x
topology: tpu7x:2x2x1
jax: 0.10.0
libtpu: 0.0.40
codegen_flags: <defaults>
</compile_context>

<pallas_src>
import functools
import inspect
import math

import numpy as np
import jax
import jax.numpy as jnp
from jax.experimental import pallas as pl
from jax.experimental.pallas import tpu as pltpu

_LANE = 128
_SUBLANE = 8


# ----------------------------------------------------------------------------
# Small helpers
# ----------------------------------------------------------------------------
def _round_up(x, m):
    return (x + m - 1) // m * m


def _nbytes(shape, dtype):
    return int(np.prod(shape)) * jnp.dtype(dtype).itemsize


def _pad2d(a, rows, cols):
    pr, pc = rows - a.shape[0], cols - a.shape[1]
    if pr == 0 and pc == 0:
        return a
    return jnp.pad(a, ((0, pr), (0, pc)))


def _vmem_budget_bytes():
    """Per-TensorCore VMEM budget with ~25% headroom for Mosaic internal scratch."""
    cap = 128 * 1024 * 1024
    try:
        cap = int(pltpu.get_tpu_info().vmem_capacity_bytes)  # 64 MiB/TC on v7x
    except Exception:
        pass  # conservative fallback if the query is unavailable
    return int(cap * 3 // 4)


@functools.lru_cache(maxsize=1)
def _buffered_supported():
    """One-time feature probe: does this jax/Mosaic accept pl.Buffered(1) resident blocks?"""
    if not hasattr(pl, "Buffered"):
        return False
    try:
        if "pipeline_mode" not in inspect.signature(pl.BlockSpec).parameters:
            return False

        def _probe(x_ref, w_ref, o_ref):
            o_ref[...] = x_ref[...] + w_ref[...]

        out = pl.pallas_call(
            _probe,
            out_shape=jax.ShapeDtypeStruct((_SUBLANE, _LANE), jnp.float32),
            grid=(2,),
            in_specs=[
                pl.BlockSpec((_SUBLANE, _LANE), lambda i: (0, 0)),
                pl.BlockSpec((_SUBLANE, _LANE), lambda i: (0, 0),
                             pipeline_mode=pl.Buffered(1)),
            ],
            out_specs=pl.BlockSpec((_SUBLANE, _LANE), lambda i: (0, 0)),
        )(jnp.zeros((_SUBLANE, _LANE), jnp.float32),
          jnp.ones((_SUBLANE, _LANE), jnp.float32))
        jax.block_until_ready(out)
        return True
    except Exception:
        # Probe-scoped fallback only; the real kernel never hides errors this way.
        return False


# ----------------------------------------------------------------------------
# Pallas kernel: fused MLP forward (matmul + bias + ReLU chain)
# ----------------------------------------------------------------------------
def _make_mlp_kernel(n_layers):
    def kernel(*refs):
        # refs = (x_ref, w0, b0, w1, b1, ..., w_{L-1}, b_{L-1}, o_ref)
        x_ref = refs[0]
        o_ref = refs[-1]
        params = refs[1:-1]

        cdtype = x_ref.dtype           # MXU operand dtype (bf16 or f32)
        h = x_ref[...]
        for i in range(n_layers):
            w = params[2 * i][...]         # [in_pad, out_pad], pre-transposed in wrapper
            b = params[2 * i + 1][...]     # [1, out_pad], f32 (f32 epilogue)
            acc = jnp.dot(h, w, preferred_element_type=jnp.float32) + b
            if i < n_layers - 1:
                acc = jnp.maximum(acc, 0.0)    # ReLU between layers, not after last
                h = acc.astype(cdtype)         # exactly one downcast per layer
            else:
                h = acc                        # keep f32 for the output store
        o_ref[...] = h.astype(o_ref.dtype)

    return kernel


# ----------------------------------------------------------------------------
# Module wrapper: one-time param prep + jitted forward
# ----------------------------------------------------------------------------
class ShareMLPFullPallas:
    """Fused ShareMLPFull forward on TPU.

    weights: list of [out_i, in_i] arrays (PyTorch layout, already materialized
             from warp @ latent_params); biases: list of [out_i] arrays.
    compute_dtype: MXU operand dtype (default bf16; f32 accumulation + f32
             bias/ReLU epilogue always).  The returned array keeps the caller's
             input dtype, so bf16 only changes internal precision, not output type.
    """

    def __init__(self, weights, biases, *, compute_dtype=jnp.bfloat16, batch_tile=None):
        n_layers = len(weights)
        assert n_layers >= 1 and len(biases) == n_layers
        self.n_layers = n_layers
        self.compute_dtype = jnp.dtype(
            compute_dtype if compute_dtype is not None else jnp.float32)

        out_dims = [int(w.shape[0]) for w in weights]
        in_dims = [int(w.shape[1]) for w in weights]
        for i in range(1, n_layers):
            assert in_dims[i] == out_dims[i - 1]
        self.in_features = in_dims[0]
        self.out_features = out_dims[-1]

        cdtype = self.compute_dtype
        out_pads = [_round_up(o, _LANE) for o in out_dims]
        in_pads = [self.in_features] + out_pads[:-1]   # x stays unpadded; hidden dims padded
        self.out_pad = out_pads[-1]

        # --- one-time layout plumbing: [out,in] -> [in_pad,out_pad]; f32 bias rows ---
        params = []
        for i, (w, b) in enumerate(zip(weights, biases)):
            wt = _pad2d(jnp.asarray(w, cdtype).T, in_pads[i], out_pads[i])
            bt = _pad2d(jnp.asarray(b, jnp.float32).reshape(1, -1), 1, out_pads[i])
            params += [wt, bt]
        self._params = tuple(jax.device_put(p) for p in params)

        # --- per-TensorCore VMEM accounting (resident weights duplicated per TC) ---
        self._single_buffer_resident = _buffered_supported()
        buf_factor = 1 if self._single_buffer_resident else 2
        self._resident_bytes = buf_factor * sum(
            _nbytes(p.shape, p.dtype) for p in self._params)
        cd_size = jnp.dtype(cdtype).itemsize
        max_feat = max([self.in_features] + out_pads)
        # per-batch-row footprint: double-buffered x/out tiles + f32 intermediates
        self._per_row_bytes = (2 * (self.in_features * cd_size + self.out_pad * 4)
                               + 3 * max_feat * 4)
        self._vmem_budget = _vmem_budget_bytes()
        # TODO(synk): when resident weight+bias bytes exceed ~50-60% of per-TC VMEM
        # (v7x: only 64 MiB/TC), stream weights per layer (extra "arbitrary" grid axis
        # or an inner pltpu.emit_pipeline over HBM weight chunks) instead of holding
        # every layer resident.

        self._user_batch_tile = batch_tile
        # row alignment = sublane (8) x dtype packing (2 for bf16, 4 for int8/fp8)
        self._row_align = _SUBLANE * max(1, 4 // cd_size)
        self._fwd = jax.jit(self._forward)

    # -- batch tile selection (trace-time, Python ints) ----------------------
    def _select_batch_tile(self, B):
        ra = self._row_align
        B_pad = _round_up(B, ra)
        if self._user_batch_tile is not None:
            tile = _round_up(self._user_batch_tile, ra)
        else:
            avail = max(self._vmem_budget - self._resident_bytes, 1 << 20)
            max_tile = max(ra, (avail // max(self._per_row_bytes, 1)) // ra * ra)
            # target ~8 grid steps so pipeline fill/drain exposes only ~12% of the DMA
            tile = _round_up(max(1, -(-B_pad // 8)), ra)
            if B_pad >= 8 * 512:
                tile = max(tile, 512)          # keep tiles big for large batches
            tile = min(tile, max_tile)
            tile = max(ra, (tile // ra) * ra)
        return min(tile, B_pad)

    # -- jitted forward -------------------------------------------------------
    def _forward(self, x, params):
        B, fin = x.shape
        assert fin == self.in_features
        out_dtype = x.dtype
        cdtype = self.compute_dtype

        tile = self._select_batch_tile(B)
        B_full = _round_up(B, tile)           # pad awkward batches instead of tiny tiles
        grid = (B_full // tile,)

        xc = x.astype(cdtype)
        if B_full != B:
            xc = jnp.pad(xc, ((0, B_full - B), (0, 0)))

        res_kwargs = ({"pipeline_mode": pl.Buffered(1)}
                      if self._single_buffer_resident else {})
        in_specs = [pl.BlockSpec((tile, self.in_features), lambda i: (i, 0))]
        for p in params:
            # constant index_map => resident across the batch grid; 1 buffer halves VMEM
            in_specs.append(pl.BlockSpec(p.shape, lambda i: (0, 0), **res_kwargs))
        out_specs = pl.BlockSpec((tile, self.out_pad), lambda i: (i, 0))

        vmem_limit = int(min(
            self._vmem_budget,
            max(32 << 20,
                self._resident_bytes + 2 * tile * self._per_row_bytes + (4 << 20))))

        out_padded = pl.pallas_call(
            _make_mlp_kernel(self.n_layers),
            out_shape=jax.ShapeDtypeStruct((B_full, self.out_pad), out_dtype),
            grid=grid,
            in_specs=in_specs,
            out_specs=out_specs,
            compiler_params=pltpu.CompilerParams(
                dimension_semantics=("parallel",),   # megacore-shardable batch axis
                vmem_limit_bytes=vmem_limit,
            ),
        )(xc, *params)

        # Under jit this slice fuses with downstream consumers (no extra HBM pass).
        return out_padded[:B, :self.out_features]

    def __call__(self, x):
        return self._fwd(x, self._params)


# ----------------------------------------------------------------------------
# Parameter setup (mimics ShareLinearFull.reset_parameters; plain JAX)
# ----------------------------------------------------------------------------
def init_share_linear(key, in_features, out_features, latent_size=3):
    k_warp, k_latent, k_bias = jax.random.split(key, 3)
    warp = 0.01 * jax.random.normal(
        k_warp, (in_features * out_features, latent_size), dtype=jnp.float32)
    latent = (1.0 / out_features) * jax.random.normal(
        k_latent, (latent_size,), dtype=jnp.float32)
    # weight = (warp @ latent_params).view(out, in)  -- one-time setup, plain JAX
    weight = (warp @ latent).reshape(out_features, in_features)
    bound = 1.0 / math.sqrt(in_features)
    bias = jax.random.uniform(
        k_bias, (out_features,), minval=-bound, maxval=bound, dtype=jnp.float32)
    return weight, bias


def build_share_mlp_params(key, in_features, hidden_size, num_hidden_layers,
                           out_features, latent_size=3):
    assert num_hidden_layers >= 1
    dims = [(in_features, hidden_size)]
    for _ in range(num_hidden_layers - 1):
        dims.append((hidden_size, hidden_size))
    dims.append((hidden_size, out_features))

    keys = jax.random.split(key, len(dims))
    weights, biases = [], []
    for k, (fin, fout) in zip(keys, dims):
        w, b = init_share_linear(k, fin, fout, latent_size)
        weights.append(w)
        biases.append(b)
    return weights, biases


# ----------------------------------------------------------------------------
# Pure-JAX reference (for correctness check)
# ----------------------------------------------------------------------------
def reference_forward(x, weights, biases):
    h = x
    n = len(weights)
    for i, (w, b) in enumerate(zip(weights, biases)):
        h = h @ w.T + b
        if i < n - 1:
            h = jnp.maximum(h, 0.0)
    return h


# ----------------------------------------------------------------------------
# Main
# ----------------------------------------------------------------------------
if __name__ == "__main__":
    key = jax.random.PRNGKey(0)
    k_params, k_x = jax.random.split(key)

    # Small shapes consistent with the module; hidden_size deliberately not a
    # multiple of 128 to exercise the lane-padding invariant.
    batch = 64
    in_features = 16
    hidden_size = 32
    num_hidden_layers = 2    # -> 3 ShareLinearFull layers total
    out_features = 8
    latent_size = 3

    weights, biases = build_share_mlp_params(
        k_params, in_features, hidden_size, num_hidden_layers,
        out_features, latent_size)

    x = jax.random.normal(k_x, (batch, in_features), dtype=jnp.float32)
    ref = jax.block_until_ready(reference_forward(x, weights, biases))

    # Exact f32-operand path: tight tolerance against the f32 reference.
    mlp_f32 = ShareMLPFullPallas(weights, biases, compute_dtype=jnp.float32)
    out_f32 = jax.block_until_ready(mlp_f32(x))
    np.testing.assert_allclose(np.asarray(out_f32), np.asarray(ref),
                               rtol=1e-5, atol=1e-5)

    # Default bf16 MXU operands (f32 accumulation / epilogue), f32 output dtype.
    mlp_bf16 = ShareMLPFullPallas(weights, biases)
    out_bf16 = jax.block_until_ready(mlp_bf16(x))
    assert out_bf16.dtype == x.dtype
    np.testing.assert_allclose(np.asarray(out_bf16), np.asarray(ref),
                               rtol=2e-2, atol=2e-2)

    # Awkward batch size (not a multiple of 8): exercises row padding / un-padding.
    x_odd = x[:50]
    ref_odd = reference_forward(x_odd, weights, biases)
    out_odd = jax.block_until_ready(mlp_f32(x_odd))
    np.testing.assert_allclose(np.asarray(out_odd), np.asarray(ref_odd),
                               rtol=1e-5, atol=1e-5)

    print("KERNEL_OK")
</pallas_src>

<mosaic_0001>
module attributes {stable_mosaic.version = 11 : i64} {
  func.func @_probe(%arg0: i32, %arg1: memref<8x128xf32, #tpu.memory_space<vmem>>, %arg2: memref<8x128xf32, #tpu.memory_space<vmem>>, %arg3: memref<8x128xf32, #tpu.memory_space<vmem>>) attributes {dimension_semantics = [#tpu.dimension_semantics<arbitrary>], iteration_bounds = array<i64: 2>, scalar_prefetch = 0 : i64, scratch_operands = 0 : i64, tpu.core_type = #tpu.core_type<tc>, window_params = [{pipeline_mode = #tpu.pipeline_mode<synchronous>, transform_indices = @transform_0, window_bounds = array<i64: 8, 128>}, {pipeline_mode = #tpu.pipeline_mode<synchronous>, transform_indices = @transform_1, window_bounds = array<i64: 8, 128>}, {pipeline_mode = #tpu.pipeline_mode<synchronous>, transform_indices = @transform_2, window_bounds = array<i64: 8, 128>}]} {
    %c0 = arith.constant 0 : index
    %c0_0 = arith.constant 0 : index
    %0 = vector.load %arg1[%c0, %c0_0] : memref<8x128xf32, #tpu.memory_space<vmem>>, vector<8x128xf32>
    %c0_1 = arith.constant 0 : index
    %c0_2 = arith.constant 0 : index
    %1 = vector.load %arg2[%c0_1, %c0_2] : memref<8x128xf32, #tpu.memory_space<vmem>>, vector<8x128xf32>
    %2 = arith.addf %0, %1 : vector<8x128xf32>
    %c0_3 = arith.constant 0 : index
    %c0_4 = arith.constant 0 : index
    %3 = vector.load %arg3[%c0_3, %c0_4] : memref<8x128xf32, #tpu.memory_space<vmem>>, vector<8x128xf32>
    tpu.vector_store %arg3[%c0_3, %c0_4], %2 {strides = array<i32>} : memref<8x128xf32, #tpu.memory_space<vmem>>, vector<8x128xf32>,
    return
  }
  func.func @transform_0(%arg0: i32) -> (i32, i32) {
    %c0_i32 = arith.constant 0 : i32
    %c0_i32_0 = arith.constant 0 : i32
    %c0_i32_1 = arith.constant 0 : i32
    return %c0_i32, %c0_i32_0 : i32, i32
  }
  func.func @transform_1(%arg0: i32) -> (i32, i32) {
    %c0_i32 = arith.constant 0 : i32
    %c0_i32_0 = arith.constant 0 : i32
    %c0_i32_1 = arith.constant 0 : i32
    return %c0_i32, %c0_i32_0 : i32, i32
  }
  func.func @transform_2(%arg0: i32) -> (i32, i32) {
    %c0_i32 = arith.constant 0 : i32
    %c0_i32_0 = arith.constant 0 : i32
    %c0_i32_1 = arith.constant 0 : i32
    return %c0_i32, %c0_i32_0 : i32, i32
  }
}

module attributes {stable_mosaic.version = 11 : i64} {
  func.func @kernel(%arg0: i32, %arg1: memref<8x16xf32, #tpu.memory_space<vmem>>, %arg2: memref<16x128xf32, #tpu.memory_space<vmem>>, %arg3: memref<1x128xf32, #tpu.memory_space<vmem>>, %arg4: memref<128x128xf32, #tpu.memory_space<vmem>>, %arg5: memref<1x128xf32, #tpu.memory_space<vmem>>, %arg6: memref<128x128xf32, #tpu.memory_space<vmem>>, %arg7: memref<1x128xf32, #tpu.memory_space<vmem>>, %arg8: memref<8x128xf32, #tpu.memory_space<vmem>>) attributes {dimension_semantics = [#tpu.dimension_semantics<parallel>], iteration_bounds = array<i64: 8>, scalar_prefetch = 0 : i64, scratch_operands = 0 : i64, tpu.core_type = #tpu.core_type<tc>, window_params = [{transform_indices = @transform_0, window_bounds = array<i64: 8, 16>}, {pipeline_mode = #tpu.pipeline_mode<synchronous>, transform_indices = @transform_1, window_bounds = array<i64: 16, 128>}, {pipeline_mode = #tpu.pipeline_mode<synchronous>, transform_indices = @transform_2, window_bounds = array<i64: 1, 128>}, {pipeline_mode = #tpu.pipeline_mode<synchronous>, transform_indices = @transform_3, window_bounds = array<i64: 128, 128>}, {pipeline_mode = #tpu.pipeline_mode<synchronous>, transform_indices = @transform_4, window_bounds = array<i64: 1, 128>}, {pipeline_mode = #tpu.pipeline_mode<synchronous>, transform_indices = @transform_5, window_bounds = array<i64: 128, 128>}, {pipeline_mode = #tpu.pipeline_mode<synchronous>, transform_indices = @transform_6, window_bounds = array<i64: 1, 128>}, {transform_indices = @transform_7, window_bounds = array<i64: 8, 128>}]} {
    %c0 = arith.constant 0 : index
    %c0_0 = arith.constant 0 : index
    %0 = vector.load %arg1[%c0, %c0_0] : memref<8x16xf32, #tpu.memory_space<vmem>>, vector<8x16xf32>
    %c0_1 = arith.constant 0 : index
    %c0_2 = arith.constant 0 : index
    %1 = vector.load %arg2[%c0_1, %c0_2] : memref<16x128xf32, #tpu.memory_space<vmem>>, vector<16x128xf32>
    %c0_3 = arith.constant 0 : index
    %c0_4 = arith.constant 0 : index
    %2 = vector.load %arg3[%c0_3, %c0_4] : memref<1x128xf32, #tpu.memory_space<vmem>>, vector<1x128xf32>
    %cst = arith.constant dense<0.000000e+00> : vector<8x128xf32>
    %3 = tpu.matmul %0, %1, %cst {dimension_numbers = #tpu.dot_dimension_numbers<[1], [0], [0], [1], [0, 0, 1, 1], [], []>} : vector<8x16xf32>, vector<16x128xf32>, vector<8x128xf32> -> vector<8x128xf32>
    %4 = vector.broadcast %2 : vector<1x128xf32> to vector<8x128xf32>
    %5 = arith.addf %3, %4 : vector<8x128xf32>
    %cst_5 = arith.constant 0.000000e+00 : f32
    %6 = vector.broadcast %cst_5 : f32 to vector<8x128xf32>
    %7 = arith.maximumf %5, %6 : vector<8x128xf32>
    %c0_6 = arith.constant 0 : index
    %c0_7 = arith.constant 0 : index
    %8 = vector.load %arg4[%c0_6, %c0_7] : memref<128x128xf32, #tpu.memory_space<vmem>>, vector<128x128xf32>
    %c0_8 = arith.constant 0 : index
    %c0_9 = arith.constant 0 : index
    %9 = vector.load %arg5[%c0_8, %c0_9] : memref<1x128xf32, #tpu.memory_space<vmem>>, vector<1x128xf32>
    %cst_10 = arith.constant dense<0.000000e+00> : vector<8x128xf32>
    %10 = tpu.matmul %7, %8, %cst_10 {dimension_numbers = #tpu.dot_dimension_numbers<[1], [0], [0], [1], [0, 0, 1, 1], [], []>} : vector<8x128xf32>, vector<128x128xf32>, vector<8x128xf32> -> vector<8x128xf32>
    %11 = vector.broadcast %9 : vector<1x128xf32> to vector<8x128xf32>
    %12 = arith.addf %10, %11 : vector<8x128xf32>
    %cst_11 = arith.constant 0.000000e+00 : f32
    %13 = vector.broadcast %cst_11 : f32 to vector<8x128xf32>
    %14 = arith.maximumf %12, %13 : vector<8x128xf32>
    %c0_12 = arith.constant 0 : index
    %c0_13 = arith.constant 0 : index
    %15 = vector.load %arg6[%c0_12, %c0_13] : memref<128x128xf32, #tpu.memory_space<vmem>>, vector<128x128xf32>
    %c0_14 = arith.constant 0 : index
    %c0_15 = arith.constant 0 : index
    %16 = vector.load %arg7[%c0_14, %c0_15] : memref<1x128xf32, #tpu.memory_space<vmem>>, vector<1x128xf32>
    %cst_16 = arith.constant dense<0.000000e+00> : vector<8x128xf32>
    %17 = tpu.matmul %14, %15, %cst_16 {dimension_numbers = #tpu.dot_dimension_numbers<[1], [0], [0], [1], [0, 0, 1, 1], [], []>} : vector<8x128xf32>, vector<128x128xf32>, vector<8x128xf32> -> vector<8x128xf32>
    %18 = vector.broadcast %16 : vector<1x128xf32> to vector<8x128xf32>
    %19 = arith.addf %17, %18 : vector<8x128xf32>
    %c0_17 = arith.constant 0 : index
    %c0_18 = arith.constant 0 : index
    %20 = vector.load %arg8[%c0_17, %c0_18] : memref<8x128xf32, #tpu.memory_space<vmem>>, vector<8x128xf32>
    tpu.vector_store %arg8[%c0_17, %c0_18], %19 {strides = array<i32>} : memref<8x128xf32, #tpu.memory_space<vmem>>, vector<8x128xf32>,
    return
  }
  func.func @transform_0(%arg0: i32) -> (i32, i32) {
    %c0_i32 = arith.constant 0 : i32
    %c0_i32_0 = arith.constant 0 : i32
    return %arg0, %c0_i32 : i32, i32
  }
  func.func @transform_1(%arg0: i32) -> (i32, i32) {
    %c0_i32 = arith.constant 0 : i32
    %c0_i32_0 = arith.constant 0 : i32
    %c0_i32_1 = arith.constant 0 : i32
    return %c0_i32, %c0_i32_0 : i32, i32
  }
  func.func @transform_2(%arg0: i32) -> (i32, i32) {
    %c0_i32 = arith.constant 0 : i32
    %c0_i32_0 = arith.constant 0 : i32
    %c0_i32_1 = arith.constant 0 : i32
    return %c0_i32, %c0_i32_0 : i32, i32
  }
  func.func @transform_3(%arg0: i32) -> (i32, i32) {
    %c0_i32 = arith.constant 0 : i32
    %c0_i32_0 = arith.constant 0 : i32
    %c0_i32_1 = arith.constant 0 : i32
    return %c0_i32, %c0_i32_0 : i32, i32
  }
  func.func @transform_4(%arg0: i32) -> (i32, i32) {
    %c0_i32 = arith.constant 0 : i32
    %c0_i32_0 = arith.constant 0 : i32
    %c0_i32_1 = arith.constant 0 : i32
    return %c0_i32, %c0_i32_0 : i32, i32
  }
  func.func @transform_5(%arg0: i32) -> (i32, i32) {
    %c0_i32 = arith.constant 0 : i32
    %c0_i32_0 = arith.constant 0 : i32
    %c0_i32_1 = arith.constant 0 : i32
    return %c0_i32, %c0_i32_0 : i32, i32
  }
  func.func @transform_6(%arg0: i32) -> (i32, i32) {
    %c0_i32 = arith.constant 0 : i32
    %c0_i32_0 = arith.constant 0 : i32
    %c0_i32_1 = arith.constant 0 : i32
    return %c0_i32, %c0_i32_0 : i32, i32
  }
  func.func @transform_7(%arg0: i32) -> (i32, i32) {
    %c0_i32 = arith.constant 0 : i32
    %c0_i32_0 = arith.constant 0 : i32
    return %arg0, %c0_i32 : i32, i32
  }
}

</mosaic_0001>

<llo_original>
// kernel: tpu_custom_call.1
$region0: #{tpu_custom_call.1}
  #allocation0 [shape = 'u32[]', space=smem, size = 0x4, offset = 0x4, fixed_abs, tag = 'smem constant byte address 0x4 - core index']
  #allocation1 [shape = 'u32[144,128]{1,0:T(1,128)}', space=vmem, size = 0x12000, scoped, tag = 'internal scratch']
  %s0 = inlined_call_operand.hbm [shape: f32[8,128], index: 0, kind: input, shape index: {}]
  %s1 = inlined_call_operand.hbm [shape: f32[8,128], index: 1, kind: input, shape index: {}]
  %s2 = inlined_call_operand.hbm [shape: f32[8,128], index: 2, kind: output, shape index: {}]
  %s3 = sld [smem:[#allocation0]]
  $region49: #{tpu_custom_call.1} parent=0
    _
  %s5 = ssub.s32 1, %s3
  %s6 = scalar_select 0, %s5, %s3
  $region1: #{tpu_custom_call.1} parent=0
    #allocation2 [shape = 'u8[4096]{0}', space=vmem, size = 0x1000, scoped, tag = 'input window, operand 0, single buffered']
    #allocation3 [shape = 's32[2]{0}', space=sflag, size = 0x8, scoped, tag = 'scoped memory for tpu_custom_call.1']
    #allocation4 [shape = 's32[2]{0}', space=sflag, size = 0x8, scoped, tag = 'scoped memory for tpu_custom_call.1']
    #allocation5 [shape = 'u8[4096]{0}', space=vmem, size = 0x1000, scoped, tag = 'input window, operand 1, single buffered']
    #allocation6 [shape = 's32[1]{0}', space=sflag, size = 0x4, scoped, tag = 'scoped memory for tpu_custom_call.1']
    #allocation7 [shape = 'u8[4096]{0}', space=vmem, size = 0x1000, scoped, tag = 'output window, operand 0, single buffered']
    %7 = vsyncpa [#allocation3], 0
    %8 = vsyncpa [#allocation6], 0
    %9 = vsyncpa [#allocation4], 0
    loop: start=0, step=1, limit=4
    $region2: #{tpu_custom_call.1} parent=1 // loop_pre_header
      _
    $region3: #{tpu_custom_call.1} parent=1 // loop_header
      %s11 = sphi 0, %s15
      %p12 = scmp.ge.s32.totalorder %s11, 4
      %s19 = sphi 0, %s19
      %s21 = sphi 0, %s19
      %s22 = sphi 0, %s21
      %s36 = sphi 0, %s22
      %s40 = sphi 0, %s40
      %s42 = sphi 0, %s40
      %s43 = sphi 0, %s42
      %s57 = sphi 0, %s43
      %s61 = sphi 0, %s61
      %s63 = sphi 0, %s61
      %s64 = sphi 0, %s63
      %s78 = sphi 0, %s64
    $region4: #{tpu_custom_call.1} parent=1 // loop_header_branch
      %14 = sbr.rel (%p12) target = $region8
    $region5: #{tpu_custom_call.1} parent=1 // loop_body
      %s16 = ssub.s32 %s11, 1
      %s17 = ssub.s32 %s11, 2
      %s18 = sadd.s32 %s11, 1
      %s20 = sadd.s32 %s19, 1
      %p23 = scmp.eq.s32.totalorder %s11, 1
      %p24 = scmp.ne.s32.totalorder %s19, %s21
      %p25 = scmp.eq.s32.totalorder %s11, 0
      %p26 = por %p24, %p25
      %p27 = scmp.ne.s32.totalorder %s19, %s21
      %p28 = scmp.eq.s32.totalorder %s16, 1
      %p29 = por %p27, %p28
      %p30 = scmp.ne.s32.totalorder %s21, %s22
      %p31 = scmp.eq.s32.totalorder %s16, 0
      %p32 = por %p30, %p31
      %p33 = scmp.ne.s32.totalorder %s21, %s22
      %p34 = scmp.eq.s32.totalorder %s17, 1
      %p35 = por %p33, %p34
      %p37 = scmp.ne.s32.totalorder %s22, %s36
      %p38 = scmp.eq.s32.totalorder %s17, 0
      %p39 = por %p37, %p38
      %s41 = sadd.s32 %s40, 1
      %p44 = scmp.eq.s32.totalorder %s11, 1
      %p45 = scmp.ne.s32.totalorder %s40, %s42
      %p46 = scmp.eq.s32.totalorder %s11, 0
      %p47 = por %p45, %p46
      %p48 = scmp.ne.s32.totalorder %s40, %s42
      %p49 = scmp.eq.s32.totalorder %s16, 1
      %p50 = por %p48, %p49
      %p51 = scmp.ne.s32.totalorder %s42, %s43
      %p52 = scmp.eq.s32.totalorder %s16, 0
      %p53 = por %p51, %p52
      %p54 = scmp.ne.s32.totalorder %s42, %s43
      %p55 = scmp.eq.s32.totalorder %s17, 1
      %p56 = por %p54, %p55
      %p58 = scmp.ne.s32.totalorder %s43, %s57
      %p59 = scmp.eq.s32.totalorder %s17, 0
      %p60 = por %p58, %p59
      %s62 = sadd.s32 %s61, 1
      %p65 = scmp.eq.s32.totalorder %s11, 1
      %p66 = scmp.ne.s32.totalorder %s61, %s63
      %p67 = scmp.eq.s32.totalorder %s11, 0
      %p68 = por %p66, %p67
      %p69 = scmp.ne.s32.totalorder %s61, %s63
      %p70 = scmp.eq.s32.totalorder %s16, 1
      %p71 = por %p69, %p70
      %p72 = scmp.ne.s32.totalorder %s63, %s64
      %p73 = scmp.eq.s32.totalorder %s16, 0
      %p74 = por %p72, %p73
      %p75 = scmp.ne.s32.totalorder %s63, %s64
      %p76 = scmp.eq.s32.totalorder %s17, 1
      %p77 = por %p75, %p76
      %p79 = scmp.ne.s32.totalorder %s64, %s78
      %p80 = scmp.eq.s32.totalorder %s17, 0
      %p81 = por %p79, %p80
      %p82 = scmp.le.s32.totalorder 1, %s11
      %p83 = scmp.lt.s32.totalorder %s11, 3
      %p84 = pnand %p82, %p83
      %p85 = pneg %p84
      // Predicated region
      $region9: #{tpu_custom_call.1} parent=5 // pred_check
        _
      $region10: #{tpu_custom_call.1} parent=5 // pred_check_branch
        %87 = sbr.rel (%p84) target = $region12
      $region11: #{tpu_custom_call.1} parent=5 // pred_region
        %s88 = ssub.s32 %s11, 1
        // Predicated region
        $region13: #{tpu_custom_call.1} parent=11 // pred_check
          %p89 = pneg %p32
        $region14: #{tpu_custom_call.1} parent=11 // pred_check_branch
          %91 = sbr.rel (%p89) target = $region16
        $region15: #{tpu_custom_call.1} parent=11 // pred_region
          %s93 = ssub.s32 128, 128
          %94 = vsyncadd [#allocation3], %s93
          %s96 = sshll.u32 [#allocation2], 4
          %s97 = int_to_ptr.vmem [resolvable:$true] %s96
          %99 = dma.hbm_to_vmem [thread:$0]  %s0, 128, %s97, [#allocation3]
        $region16: #{tpu_custom_call.1} parent=11 // pred_fallthru
          _
        // Predicated region
        $region17: #{tpu_custom_call.1} parent=11 // pred_check
          %p100 = pneg %p53
        $region18: #{tpu_custom_call.1} parent=11 // pred_check_branch
          %102 = sbr.rel (%p100) target = $region20
        $region19: #{tpu_custom_call.1} parent=11 // pred_region
          %s104 = ssub.s32 128, 128
          %105 = vsyncadd [#allocation6], %s104
          %s107 = sshll.u32 [#allocation5], 4
          %s108 = int_to_ptr.vmem [resolvable:$true] %s107
          %110 = dma.hbm_to_vmem [thread:$0]  %s1, 128, %s108, [#allocation6]
        $region20: #{tpu_custom_call.1} parent=11 // pred_fallthru
          _
      $region12: #{tpu_custom_call.1} parent=5 // pred_fallthru
        _
      %p111 = scmp.lt.s32.totalorder %s11, 2
      // Predicated region
      $region21: #{tpu_custom_call.1} parent=5 // pred_check
        %p112 = pneg %p111
      $region22: #{tpu_custom_call.1} parent=5 // pred_check_branch
        %114 = sbr.rel (%p112) target = $region24
      $region23: #{tpu_custom_call.1} parent=5 // pred_region
        _
      $region24: #{tpu_custom_call.1} parent=5 // pred_fallthru
        _
      %p115 = scmp.le.s32.totalorder 1, %s11
      %p116 = scmp.lt.s32.totalorder %s11, 3
      %p117 = pnand %p115, %p116
      %p118 = pneg %p117
      // Predicated region
      $region25: #{tpu_custom_call.1} parent=5 // pred_check
        _
      $region26: #{tpu_custom_call.1} parent=5 // pred_check_branch
        %120 = sbr.rel (%p117) target = $region28
      $region27: #{tpu_custom_call.1} parent=5 // pred_region
        %s121 = ssub.s32 %s11, 1
        // Predicated region
        $region29: #{tpu_custom_call.1} parent=27 // pred_check
          %p122 = pneg %p32
        $region30: #{tpu_custom_call.1} parent=27 // pred_check_branch
          %124 = sbr.rel (%p122) target = $region32
        $region31: #{tpu_custom_call.1} parent=27 // pred_region
          %125 = dma.done [#allocation3], 128
        $region32: #{tpu_custom_call.1} parent=27 // pred_fallthru
          _
        // Predicated region
        $region33: #{tpu_custom_call.1} parent=27 // pred_check
          %p126 = pneg %p53
        $region34: #{tpu_custom_call.1} parent=27 // pred_check_branch
          %128 = sbr.rel (%p126) target = $region36
        $region35: #{tpu_custom_call.1} parent=27 // pred_region
          %129 = dma.done [#allocation6], 128
        $region36: #{tpu_custom_call.1} parent=27 // pred_fallthru
          _
        %p130 = pneg %p32
        %p131 = pneg %p29
        %p132 = pneg %p53
        %p133 = pneg %p50
        %p134 = pneg %p74
        %p135 = pneg %p71
        %v136 = vld [vmem:[#allocation2] sm:$0xff]
        %v137 = vld [vmem:[#allocation5] sm:$0xff]
        %v138 = vadd.f32 %v136, %v137
        %139 = vst [vmem:[#allocation7] sm:$0xff] %v138
        // Predicated region
        $region37: #{tpu_custom_call.1} parent=27 // pred_check
          %p140 = pneg %p71
        $region38: #{tpu_custom_call.1} parent=27 // pred_check_branch
          %142 = sbr.rel (%p140) target = $region40
        $region39: #{tpu_custom_call.1} parent=27 // pred_region
          %s144 = ssub.s32 128, 128
          %145 = vsyncadd [#allocation4], %s144
          %s147 = sshll.u32 [#allocation7], 4
          %s148 = int_to_ptr.vmem [resolvable:$true] %s147
          %150 = dma.vmem_to_hbm [thread:$0]  %s148, 128, %s2, [#allocation4]
        $region40: #{tpu_custom_call.1} parent=27 // pred_fallthru
          _
        // Predicated region
        $region41: #{tpu_custom_call.1} parent=27 // pred_check
          %p151 = pneg %p71
        $region42: #{tpu_custom_call.1} parent=27 // pred_check_branch
          %153 = sbr.rel (%p151) target = $region44
        $region43: #{tpu_custom_call.1} parent=27 // pred_region
          %154 = dma.done [#allocation4], 128
        $region44: #{tpu_custom_call.1} parent=27 // pred_fallthru
          _
      $region28: #{tpu_custom_call.1} parent=5 // pred_fallthru
        _
      %p155 = scmp.le.s32.totalorder 2, %s11
      // Predicated region
      $region45: #{tpu_custom_call.1} parent=5 // pred_check
        %p156 = pneg %p155
      $region46: #{tpu_custom_call.1} parent=5 // pred_check_branch
        %158 = sbr.rel (%p156) target = $region48
      $region47: #{tpu_custom_call.1} parent=5 // pred_region
        %s159 = ssub.s32 %s11, 2
      $region48: #{tpu_custom_call.1} parent=5 // pred_fallthru
        _
    $region6: #{tpu_custom_call.1} parent=1 // loop_footer
      %s15 = sadd.s32 1, %s11
    $region7: #{tpu_custom_call.1} parent=1 // loop_footer_branch
      %10 = sbr.rel target = $region3
    $region8: #{tpu_custom_call.1} parent=1 // loop_exit
      _
    %160 = vsyncpa [#allocation3], 1
    %s161 = scalar_lea.sflag [#allocation3], 1
    %162 = vsyncpa %s161, 1
    %163 = vsyncpa [#allocation6], 1
    %164 = vsyncpa [#allocation4], 1
    %s165 = scalar_lea.sflag [#allocation4], 1
    %166 = vsyncpa %s165, 1

// kernel: _forward.1
$region0: #{_forward.1}
  #allocation0 [shape = 'u32[]', space=smem, size = 0x4, offset = 0x4, fixed_abs, tag = 'smem constant byte address 0x4 - core index']
  #allocation1 [shape = 'u32[144,128]{1,0:T(1,128)}', space=vmem, size = 0x12000, scoped, tag = 'internal scratch']
  %s0 = inlined_call_operand.vmem [shape: f32[64,16], index: 0, kind: input, shape index: {}]
  %s1 = inlined_call_operand.vmem [shape: f32[16,128], index: 1, kind: input, shape index: {}]
  %s2 = inlined_call_operand.vmem [shape: f32[1,128], index: 2, kind: input, shape index: {}]
  %s3 = inlined_call_operand.hbm [shape: f32[128,128], index: 3, kind: input, shape index: {}]
  %s4 = inlined_call_operand.vmem [shape: f32[1,128], index: 4, kind: input, shape index: {}]
  %s5 = inlined_call_operand.hbm [shape: f32[128,128], index: 5, kind: input, shape index: {}]
  %s6 = inlined_call_operand.vmem [shape: f32[1,128], index: 6, kind: input, shape index: {}]
  %s7 = inlined_call_operand.vmem [shape: f32[64,128], index: 7, kind: output, shape index: {}]
  %s8 = sld [smem:[#allocation0]]
  $region69: #{_forward.1} parent=0
    _
  %s10 = ssub.s32 1, %s8
  %s11 = scalar_select 0, %s10, %s8
  $region1: #{_forward.1} parent=0
    #allocation2 [shape = 'u8[65536]{0}', space=vmem, size = 0x10000, scoped, tag = 'input window, operand 3, single buffered']
    #allocation3 [shape = 's32[2]{0}', space=sflag, size = 0x8, scoped, tag = 'scoped memory for _forward.1']
    #allocation4 [shape = 'u8[65536]{0}', space=vmem, size = 0x10000, scoped, tag = 'input window, operand 5, single buffered']
    #allocation5 [shape = 's32[1]{0}', space=sflag, size = 0x4, scoped, tag = 'scoped memory for _forward.1']
    %12 = vsyncpa [#allocation3], 0
    %13 = vsyncpa [#allocation5], 0
    loop: start=0, step=1, limit=10
    $region2: #{_forward.1} parent=1 // loop_pre_header
      _
    $region3: #{_forward.1} parent=1 // loop_header
      %s15 = sphi 0, %s19
      %p16 = scmp.ge.s32.totalorder %s15, 10
      %s25 = sphi 0, %s27
      %s28 = sphi 0, %s25
      %s29 = sphi 0, %s28
      %s45 = sphi 0, %s29
      %s49 = sphi 0, %s49
      %s51 = sphi 0, %s49
      %s52 = sphi 0, %s51
      %s66 = sphi 0, %s52
      %s70 = sphi 0, %s70
      %s72 = sphi 0, %s70
      %s73 = sphi 0, %s72
      %s87 = sphi 0, %s73
      %s91 = sphi 0, %s91
      %s93 = sphi 0, %s91
      %s94 = sphi 0, %s93
      %s108 = sphi 0, %s94
      %s112 = sphi 0, %s112
      %s114 = sphi 0, %s112
      %s115 = sphi 0, %s114
      %s129 = sphi 0, %s115
      %s133 = sphi 0, %s133
      %s135 = sphi 0, %s133
      %s136 = sphi 0, %s135
      %s150 = sphi 0, %s136
      %s154 = sphi 0, %s154
      %s156 = sphi 0, %s154
      %s157 = sphi 0, %s156
      %s171 = sphi 0, %s157
      %s177 = sphi 0, %s179
      %s180 = sphi 0, %s177
      %s181 = sphi 0, %s180
      %s197 = sphi 0, %s181
    $region4: #{_forward.1} parent=1 // loop_header_branch
      %18 = sbr.rel (%p16) target = $region8
    $region5: #{_forward.1} parent=1 // loop_body
      %s20 = ssub.s32 %s15, 1
      %s21 = ssub.s32 %s15, 2
      %s22 = sadd.s32 %s15, 1
      %s23 = ssub.s32 %s15, %s22
      %p24 = scmp.eq.s32.totalorder %s23, 0
      %s26 = sadd.s32 %s25, 1
      %s27 = scalar_select %p24, %s25, %s26
      %p30 = pneg %p24
      %p31 = scmp.eq.s32.totalorder %s15, 7
      %p32 = por %p30, %p31
      %p33 = scmp.ne.s32.totalorder %s25, %s28
      %p34 = scmp.eq.s32.totalorder %s15, 0
      %p35 = por %p33, %p34
      %p36 = scmp.ne.s32.totalorder %s25, %s28
      %p37 = scmp.eq.s32.totalorder %s20, 7
      %p38 = por %p36, %p37
      %p39 = scmp.ne.s32.totalorder %s28, %s29
      %p40 = scmp.eq.s32.totalorder %s20, 0
      %p41 = por %p39, %p40
      %p42 = scmp.ne.s32.totalorder %s28, %s29
      %p43 = scmp.eq.s32.totalorder %s21, 7
      %p44 = por %p42, %p43
      %p46 = scmp.ne.s32.totalorder %s29, %s45
      %p47 = scmp.eq.s32.totalorder %s21, 0
      %p48 = por %p46, %p47
      %s50 = sadd.s32 %s49, 1
      %p53 = scmp.eq.s32.totalorder %s15, 7
      %p54 = scmp.ne.s32.totalorder %s49, %s51
      %p55 = scmp.eq.s32.totalorder %s15, 0
      %p56 = por %p54, %p55
      %p57 = scmp.ne.s32.totalorder %s49, %s51
      %p58 = scmp.eq.s32.totalorder %s20, 7
      %p59 = por %p57, %p58
      %p60 = scmp.ne.s32.totalorder %s51, %s52
      %p61 = scmp.eq.s32.totalorder %s20, 0
      %p62 = por %p60, %p61
      %p63 = scmp.ne.s32.totalorder %s51, %s52
      %p64 = scmp.eq.s32.totalorder %s21, 7
      %p65 = por %p63, %p64
      %p67 = scmp.ne.s32.totalorder %s52, %s66
      %p68 = scmp.eq.s32.totalorder %s21, 0
      %p69 = por %p67, %p68
      %s71 = sadd.s32 %s70, 1
      %p74 = scmp.eq.s32.totalorder %s15, 7
      %p75 = scmp.ne.s32.totalorder %s70, %s72
      %p76 = scmp.eq.s32.totalorder %s15, 0
      %p77 = por %p75, %p76
      %p78 = scmp.ne.s32.totalorder %s70, %s72
      %p79 = scmp.eq.s32.totalorder %s20, 7
      %p80 = por %p78, %p79
      %p81 = scmp.ne.s32.totalorder %s72, %s73
      %p82 = scmp.eq.s32.totalorder %s20, 0
      %p83 = por %p81, %p82
      %p84 = scmp.ne.s32.totalorder %s72, %s73
      %p85 = scmp.eq.s32.totalorder %s21, 7
      %p86 = por %p84, %p85
      %p88 = scmp.ne.s32.totalorder %s73, %s87
      %p89 = scmp.eq.s32.totalorder %s21, 0
      %p90 = por %p88, %p89
      %s92 = sadd.s32 %s91, 1
      %p95 = scmp.eq.s32.totalorder %s15, 7
      %p96 = scmp.ne.s32.totalorder %s91, %s93
      %p97 = scmp.eq.s32.totalorder %s15, 0
      %p98 = por %p96, %p97
      %p99 = scmp.ne.s32.totalorder %s91, %s93
      %p100 = scmp.eq.s32.totalorder %s20, 7
      %p101 = por %p99, %p100
      %p102 = scmp.ne.s32.totalorder %s93, %s94
      %p103 = scmp.eq.s32.totalorder %s20, 0
      %p104 = por %p102, %p103
      %p105 = scmp.ne.s32.totalorder %s93, %s94
      %p106 = scmp.eq.s32.totalorder %s21, 7
      %p107 = por %p105, %p106
      %p109 = scmp.ne.s32.totalorder %s94, %s108
      %p110 = scmp.eq.s32.totalorder %s21, 0
      %p111 = por %p109, %p110
      %s113 = sadd.s32 %s112, 1
      %p116 = scmp.eq.s32.totalorder %s15, 7
      %p117 = scmp.ne.s32.totalorder %s112, %s114
      %p118 = scmp.eq.s32.totalorder %s15, 0
      %p119 = por %p117, %p118
      %p120 = scmp.ne.s32.totalorder %s112, %s114
      %p121 = scmp.eq.s32.totalorder %s20, 7
      %p122 = por %p120, %p121
      %p123 = scmp.ne.s32.totalorder %s114, %s115
      %p124 = scmp.eq.s32.totalorder %s20, 0
      %p125 = por %p123, %p124
      %p126 = scmp.ne.s32.totalorder %s114, %s115
      %p127 = scmp.eq.s32.totalorder %s21, 7
      %p128 = por %p126, %p127
      %p130 = scmp.ne.s32.totalorder %s115, %s129
      %p131 = scmp.eq.s32.totalorder %s21, 0
      %p132 = por %p130, %p131
      %s134 = sadd.s32 %s133, 1
      %p137 = scmp.eq.s32.totalorder %s15, 7
      %p138 = scmp.ne.s32.totalorder %s133, %s135
      %p139 = scmp.eq.s32.totalorder %s15, 0
      %p140 = por %p138, %p139
      %p141 = scmp.ne.s32.totalorder %s133, %s135
      %p142 = scmp.eq.s32.totalorder %s20, 7
      %p143 = por %p141, %p142
      %p144 = scmp.ne.s32.totalorder %s135, %s136
      %p145 = scmp.eq.s32.totalorder %s20, 0
      %p146 = por %p144, %p145
      %p147 = scmp.ne.s32.totalorder %s135, %s136
      %p148 = scmp.eq.s32.totalorder %s21, 7
      %p149 = por %p147, %p148
      %p151 = scmp.ne.s32.totalorder %s136, %s150
      %p152 = scmp.eq.s32.totalorder %s21, 0
      %p153 = por %p151, %p152
      %s155 = sadd.s32 %s154, 1
      %p158 = scmp.eq.s32.totalorder %s15, 7
      %p159 = scmp.ne.s32.totalorder %s154, %s156
      %p160 = scmp.eq.s32.totalorder %s15, 0
      %p161 = por %p159, %p160
      %p162 = scmp.ne.s32.totalorder %s154, %s156
      %p163 = scmp.eq.s32.totalorder %s20, 7
      %p164 = por %p162, %p163
      %p165 = scmp.ne.s32.totalorder %s156, %s157
      %p166 = scmp.eq.s32.totalorder %s20, 0
      %p167 = por %p165, %p166
      %p168 = scmp.ne.s32.totalorder %s156, %s157
      %p169 = scmp.eq.s32.totalorder %s21, 7
      %p170 = por %p168, %p169
      %p172 = scmp.ne.s32.totalorder %s157, %s171
      %p173 = scmp.eq.s32.totalorder %s21, 0
      %p174 = por %p172, %p173
      %s175 = ssub.s32 %s15, %s22
      %p176 = scmp.eq.s32.totalorder %s175, 0
      %s178 = sadd.s32 %s177, 1
      %s179 = scalar_select %p176, %s177, %s178
      %p182 = pneg %p176
      %p183 = scmp.eq.s32.totalorder %s15, 7
      %p184 = por %p182, %p183
      %p185 = scmp.ne.s32.totalorder %s177, %s180
      %p186 = scmp.eq.s32.totalorder %s15, 0
      %p187 = por %p185, %p186
      %p188 = scmp.ne.s32.totalorder %s177, %s180
      %p189 = scmp.eq.s32.totalorder %s20, 7
      %p190 = por %p188, %p189
      %p191 = scmp.ne.s32.totalorder %s180, %s181
      %p192 = scmp.eq.s32.totalorder %s20, 0
      %p193 = por %p191, %p192
      %p194 = scmp.ne.s32.totalorder %s180, %s181
      %p195 = scmp.eq.s32.totalorder %s21, 7
      %p196 = por %p194, %p195
      %p198 = scmp.ne.s32.totalorder %s181, %s197
      %p199 = scmp.eq.s32.totalorder %s21, 0
      %p200 = por %p198, %p199
      %p201 = scmp.le.s32.totalorder 1, %s15
      %p202 = scmp.lt.s32.totalorder %s15, 9
      %p203 = pnand %p201, %p202
      %p204 = pneg %p203
      // Predicated region
      $region9: #{_forward.1} parent=5 // pred_check
        _
      $region10: #{_forward.1} parent=5 // pred_check_branch
        %206 = sbr.rel (%p203) target = $region12
      $region11: #{_forward.1} parent=5 // pred_region
        %s207 = ssub.s32 %s15, 1
        // Predicated region
        $region13: #{_forward.1} parent=11 // pred_check
          %p208 = pneg %p62
        $region14: #{_forward.1} parent=11 // pred_check_branch
          %210 = sbr.rel (%p208) target = $region16
        $region15: #{_forward.1} parent=11 // pred_region
          _
        $region16: #{_forward.1} parent=11 // pred_fallthru
          _
        // Predicated region
        $region17: #{_forward.1} parent=11 // pred_check
          %p211 = pneg %p83
        $region18: #{_forward.1} parent=11 // pred_check_branch
          %213 = sbr.rel (%p211) target = $region20
        $region19: #{_forward.1} parent=11 // pred_region
          _
        $region20: #{_forward.1} parent=11 // pred_fallthru
          _
        // Predicated region
        $region21: #{_forward.1} parent=11 // pred_check
          %p214 = pneg %p104
        $region22: #{_forward.1} parent=11 // pred_check_branch
          %216 = sbr.rel (%p214) target = $region24
        $region23: #{_forward.1} parent=11 // pred_region
          %s218 = ssub.s32 2048, 2048
          %219 = vsyncadd [#allocation3], %s218
          %s220 = sshll.u32 [#allocation2], 4
          %s221 = int_to_ptr.vmem [resolvable:$true] %s220
          %226 = dma.hbm_to_vmem [thread:$0]  %s3, 2048, %s221, [#allocation3], 128, 128, 8
        $region24: #{_forward.1} parent=11 // pred_fallthru
          _
        // Predicated region
        $region25: #{_forward.1} parent=11 // pred_check
          %p227 = pneg %p125
        $region26: #{_forward.1} parent=11 // pred_check_branch
          %229 = sbr.rel (%p227) target = $region28
        $region27: #{_forward.1} parent=11 // pred_region
          _
        $region28: #{_forward.1} parent=11 // pred_fallthru
          _
        // Predicated region
        $region29: #{_forward.1} parent=11 // pred_check
          %p230 = pneg %p146
        $region30: #{_forward.1} parent=11 // pred_check_branch
          %232 = sbr.rel (%p230) target = $region32
        $region31: #{_forward.1} parent=11 // pred_region
          %s234 = ssub.s32 2048, 2048
          %235 = vsyncadd [#allocation5], %s234
          %s236 = sshll.u32 [#allocation4], 4
          %s237 = int_to_ptr.vmem [resolvable:$true] %s236
          %242 = dma.hbm_to_vmem [thread:$0]  %s5, 2048, %s237, [#allocation5], 128, 128, 8
        $region32: #{_forward.1} parent=11 // pred_fallthru
          _
        // Predicated region
        $region33: #{_forward.1} parent=11 // pred_check
          %p243 = pneg %p167
        $region34: #{_forward.1} parent=11 // pred_check_branch
          %245 = sbr.rel (%p243) target = $region36
        $region35: #{_forward.1} parent=11 // pred_region
          _
        $region36: #{_forward.1} parent=11 // pred_fallthru
          _
      $region12: #{_forward.1} parent=5 // pred_fallthru
        _
      %p246 = scmp.lt.s32.totalorder %s15, 8
      // Predicated region
      $region37: #{_forward.1} parent=5 // pred_check
        %p247 = pneg %p246
      $region38: #{_forward.1} parent=5 // pred_check_branch
        %249 = sbr.rel (%p247) target = $region40
      $region39: #{_forward.1} parent=5 // pred_region
        // Predicated region
        $region41: #{_forward.1} parent=39 // pred_check
          %p250 = pneg %p35
        $region42: #{_forward.1} parent=39 // pred_check_branch
          %252 = sbr.rel (%p250) target = $region44
        $region43: #{_forward.1} parent=39 // pred_region
          %p253 = scmp.lt.s32.totalorder %s15, 7
          %s254 = scalar_select %p253, %s15, 7
          %s255 = smul.addr %s254, 8
          %s256 = scalar_lea.vmem %s0, %s255
        $region44: #{_forward.1} parent=39 // pred_fallthru
          _
      $region40: #{_forward.1} parent=5 // pred_fallthru
        _
      %p257 = scmp.le.s32.totalorder 1, %s15
      %p258 = scmp.lt.s32.totalorder %s15, 9
      %p259 = pnand %p257, %p258
      %p260 = pneg %p259
      // Predicated region
      $region45: #{_forward.1} parent=5 // pred_check
        _
      $region46: #{_forward.1} parent=5 // pred_check_branch
        %262 = sbr.rel (%p259) target = $region48
      $region47: #{_forward.1} parent=5 // pred_region
        %s263 = ssub.s32 %s15, 1
        // Predicated region
        $region49: #{_forward.1} parent=47 // pred_check
          %p264 = pneg %p104
        $region50: #{_forward.1} parent=47 // pred_check_branch
          %266 = sbr.rel (%p264) target = $region52
        $region51: #{_forward.1} parent=47 // pred_region
          %267 = dma.done [#allocation3], 2048
        $region52: #{_forward.1} parent=47 // pred_fallthru
          _
        // Predicated region
        $region53: #{_forward.1} parent=47 // pred_check
          %p268 = pneg %p146
        $region54: #{_forward.1} parent=47 // pred_check_branch
          %270 = sbr.rel (%p268) target = $region56
        $region55: #{_forward.1} parent=47 // pred_region
          %271 = dma.done [#allocation5], 2048
        $region56: #{_forward.1} parent=47 // pred_fallthru
          _
        %p272 = scmp.lt.s32.totalorder %s20, 7
        %s273 = scalar_select %p272, %s20, 7
        %s274 = smul.addr %s273, 8
        %s275 = scalar_lea.vmem %s0, %s274
        %p276 = pneg %p41
        %p277 = pneg %p38
        %p278 = pneg %p62
        %p279 = pneg %p59
        %p280 = pneg %p83
        %p281 = pneg %p80
        %p282 = pneg %p104
        %p283 = pneg %p101
        %p284 = pneg %p125
        %p285 = pneg %p122
        %p286 = pneg %p146
        %p287 = pneg %p143
        %p288 = pneg %p167
        %p289 = pneg %p164
        %p290 = pneg %p193
        %p291 = pneg %p190
        %p292 = scmp.lt.s32.totalorder %s20, 7
        %s293 = scalar_select %p292, %s20, 7
        %s294 = smul.addr %s293, 8
        %s295 = scalar_lea.vmem %s7, %s294
        %p296 = scmp.lt.s32.totalorder %s20, 7
        %s297 = scalar_select %p296, %s20, 7
        %s298 = smul.addr %s297, 8
        %s299 = scalar_lea.vmem %s0, %s298
        %p300 = scmp.lt.s32.totalorder %s20, 7
        %s301 = scalar_select %p300, %s20, 7
        %s302 = smul.addr %s301, 8
        %s303 = scalar_lea.vmem %s7, %s302
        %v304 = vld [vmem:[%s299] sm:$0xff]
        %v305 = vld [vmem:[%s1] sm:$0xff]
        %v306 = vld [vmem:[%s1 + $0x8] sm:$0xff]
        %v307 = vld [vmem:[%s2] sm:$0x1]
        %v309 = vlaneseq
        %v310 = vshrl.u32 %v309, 7
        %v311 = vsub.s32 0, %v310
        %v312 = vrot.slane %v307, %v311
        %vm314 = vcmask 130048
        %v316 = vsel %vm314, %v304, 0
        %318 = vmatprep.subr.mxu0 0.0
        %319 = vmatpush1.msra.mxu0 %v305
        %320 = vmatprep.subr.mxu0 0.0
        %321 = vmatpush1.msra.mxu0 %v306
        %322 = vmatprep.subr.mxu0 0.0
        %323 = vmatpush1.msra.mxu0 0.0
        %324 = vmatprep.subr.mxu0 0.0
        %325 = vmatpush1.msra.mxu0 0.0
        %326 = vmatprep.subr.mxu0 0.0
        %327 = vmatpush1.msra.mxu0 0.0
        %328 = vmatprep.subr.mxu0 0.0
        %329 = vmatpush1.msra.mxu0 0.0
        %330 = vmatprep.subr.mxu0 0.0
        %331 = vmatpush1.msra.mxu0 0.0
        %332 = vmatprep.subr.mxu0 0.0
        %333 = vmatpush1.msra.mxu0 0.0
        %334 = vmatprep.subr.mxu0 0.0
        %335 = vmatpush1.msra.mxu0 0.0
        %336 = vmatprep.subr.mxu0 0.0
        %337 = vmatpush1.msra.mxu0 0.0
        %338 = vmatprep.subr.mxu0 0.0
        %339 = vmatpush1.msra.mxu0 0.0
        %340 = vmatprep.subr.mxu0 0.0
        %341 = vmatpush1.msra.mxu0 0.0
        %342 = vmatprep.subr.mxu0 0.0
        %343 = vmatpush1.msra.mxu0 0.0
        %344 = vmatprep.subr.mxu0 0.0
        %345 = vmatpush1.msra.mxu0 0.0
        %346 = vmatprep.subr.mxu0 0.0
        %347 = vmatpush1.msra.mxu0 0.0
        %348 = vmatprep.subr.mxu0 0.0
        %349 = vmatpush1.msra.mxu0 0.0
        %350 = vmatprep.subr.mxu0 0.0
        %351 = vmatpush1.msra.mxu0 0.0
        %352 = vmatprep.subr.mxu0 0.0
        %353 = vmatpush1.msra.mxu0 0.0
        %354 = vmatprep.subr.mxu0 0.0
        %355 = vmatpush1.msra.mxu0 0.0
        %356 = vmatprep.subr.mxu0 0.0
        %357 = vmatpush1.msra.mxu0 0.0
        %358 = vmatprep.subr.mxu0 0.0
        %359 = vmatpush1.msra.mxu0 0.0
        %360 = vmatprep.subr.mxu0 0.0
        %361 = vmatpush1.msra.mxu0 0.0
        %362 = vmatprep.subr.mxu0 0.0
        %363 = vmatpush1.msra.mxu0 0.0
        %364 = vmatprep.subr.mxu0 0.0
        %365 = vmatpush1.msra.mxu0 0.0
        %366 = vmatprep.subr.mxu0 0.0
        %367 = vmatpush1.msra.mxu0 0.0
        %368 = vmatprep.subr.mxu0 0.0
        %369 = vmatpush1.msra.mxu0 0.0
        %370 = vmatprep.subr.mxu0 0.0
        %371 = vmatpush1.msra.mxu0 0.0
        %372 = vmatprep.subr.mxu0 0.0
        %373 = vmatpush1.msra.mxu0 0.0
        %374 = vmatprep.subr.mxu0 0.0
        %375 = vmatpush1.msra.mxu0 0.0
        %376 = vmatprep.subr.mxu0 0.0
        %377 = vmatpush1.msra.mxu0 0.0
        %378 = vmatprep.subr.mxu0 0.0
        %379 = vmatpush1.msra.mxu0 0.0
        %380 = vmatprep.subr.mxu0 0.0
        %381 = vmatpush1.msra.mxu0 0.0
        %382 = vmatprep.mubr.f32.mxu0 0.0
        %383 = vmatmul.mubr.f32.gmra.mrb[0].mxu0 %v316
        %v384 = vpop.f32.mrb[0].mxu0
        %v385 = vadd.f32 %v312, %v384
        %v386 = vpop.f32.mrb[0].mxu0
        %387 = vdwg.mxu0
        %v388 = vmax.f32 %v385, 0.0
        %v389 = vld [vmem:[#allocation2] sm:$0xff]
        %v390 = vld [vmem:[#allocation2 + $0x8] sm:$0xff]
        %v391 = vld [vmem:[#allocation2 + $0x10] sm:$0xff]
        %v392 = vld [vmem:[#allocation2 + $0x18] sm:$0xff]
        %v393 = vld [vmem:[#allocation2 + $0x20] sm:$0xff]
        %v394 = vld [vmem:[#allocation2 + $0x28] sm:$0xff]
        %v395 = vld [vmem:[#allocation2 + $0x30] sm:$0xff]
        %v396 = vld [vmem:[#allocation2 + $0x38] sm:$0xff]
        %v397 = vld [vmem:[#allocation2 + $0x40] sm:$0xff]
        %v398 = vld [vmem:[#allocation2 + $0x48] sm:$0xff]
        %v399 = vld [vmem:[#allocation2 + $0x50] sm:$0xff]
        %v400 = vld [vmem:[#allocation2 + $0x58] sm:$0xff]
        %v401 = vld [vmem:[#allocation2 + $0x60] sm:$0xff]
        %v402 = vld [vmem:[#allocation2 + $0x68] sm:$0xff]
        %v403 = vld [vmem:[#allocation2 + $0x70] sm:$0xff]
        %v404 = vld [vmem:[#allocation2 + $0x78] sm:$0xff]
        %v405 = vld [vmem:[%s4] sm:$0x1]
        %v407 = vlaneseq
        %v408 = vshrl.u32 %v407, 7
        %v409 = vsub.s32 0, %v408
        %v410 = vrot.slane %v405, %v409
        %412 = vmatprep.subr.mxu0 0.0
        %413 = vmatpush1.msra.mxu0 %v389
        %414 = vmatprep.subr.mxu0 0.0
        %415 = vmatpush1.msra.mxu0 %v390
        %416 = vmatprep.subr.mxu0 0.0
        %417 = vmatpush1.msra.mxu0 %v391
        %418 = vmatprep.subr.mxu0 0.0
        %419 = vmatpush1.msra.mxu0 %v392
        %420 = vmatprep.subr.mxu0 0.0
        %421 = vmatpush1.msra.mxu0 %v393
        %422 = vmatprep.subr.mxu0 0.0
        %423 = vmatpush1.msra.mxu0 %v394
        %424 = vmatprep.subr.mxu0 0.0
        %425 = vmatpush1.msra.mxu0 %v395
        %426 = vmatprep.subr.mxu0 0.0
        %427 = vmatpush1.msra.mxu0 %v396
        %428 = vmatprep.subr.mxu0 0.0
        %429 = vmatpush1.msra.mxu0 %v397
        %430 = vmatprep.subr.mxu0 0.0
        %431 = vmatpush1.msra.mxu0 %v398
        %432 = vmatprep.subr.mxu0 0.0
        %433 = vmatpush1.msra.mxu0 %v399
        %434 = vmatprep.subr.mxu0 0.0
        %435 = vmatpush1.msra.mxu0 %v400
        %436 = vmatprep.subr.mxu0 0.0
        %437 = vmatpush1.msra.mxu0 %v401
        %438 = vmatprep.subr.mxu0 0.0
        %439 = vmatpush1.msra.mxu0 %v402
        %440 = vmatprep.subr.mxu0 0.0
        %441 = vmatpush1.msra.mxu0 %v403
        %442 = vmatprep.subr.mxu0 0.0
        %443 = vmatpush1.msra.mxu0 %v404
        %444 = vmatprep.subr.mxu0 0.0
        %445 = vmatpush1.msra.mxu0 0.0
        %446 = vmatprep.subr.mxu0 0.0
        %447 = vmatpush1.msra.mxu0 0.0
        %448 = vmatprep.subr.mxu0 0.0
        %449 = vmatpush1.msra.mxu0 0.0
        %450 = vmatprep.subr.mxu0 0.0
        %451 = vmatpush1.msra.mxu0 0.0
        %452 = vmatprep.subr.mxu0 0.0
        %453 = vmatpush1.msra.mxu0 0.0
        %454 = vmatprep.subr.mxu0 0.0
        %455 = vmatpush1.msra.mxu0 0.0
        %456 = vmatprep.subr.mxu0 0.0
        %457 = vmatpush1.msra.mxu0 0.0
        %458 = vmatprep.subr.mxu0 0.0
        %459 = vmatpush1.msra.mxu0 0.0
        %460 = vmatprep.subr.mxu0 0.0
        %461 = vmatpush1.msra.mxu0 0.0
        %462 = vmatprep.subr.mxu0 0.0
        %463 = vmatpush1.msra.mxu0 0.0
        %464 = vmatprep.subr.mxu0 0.0
        %465 = vmatpush1.msra.mxu0 0.0
        %466 = vmatprep.subr.mxu0 0.0
        %467 = vmatpush1.msra.mxu0 0.0
        %468 = vmatprep.subr.mxu0 0.0
        %469 = vmatpush1.msra.mxu0 0.0
        %470 = vmatprep.subr.mxu0 0.0
        %471 = vmatpush1.msra.mxu0 0.0
        %472 = vmatprep.subr.mxu0 0.0
        %473 = vmatpush1.msra.mxu0 0.0
        %474 = vmatprep.subr.mxu0 0.0
        %475 = vmatpush1.msra.mxu0 0.0
        %476 = vmatprep.mubr.f32.mxu0 0.0
        %477 = vmatmul.mubr.f32.gmra.mrb[0].mxu0 %v388
        %v478 = vpop.f32.mrb[0].mxu0
        %v479 = vadd.f32 %v410, %v478
        %v480 = vpop.f32.mrb[0].mxu0
        %481 = vdwg.mxu0
        %v482 = vmax.f32 %v479, 0.0
        %v483 = vld [vmem:[#allocation4] sm:$0xff]
        %v484 = vld [vmem:[#allocation4 + $0x8] sm:$0xff]
        %v485 = vld [vmem:[#allocation4 + $0x10] sm:$0xff]
        %v486 = vld [vmem:[#allocation4 + $0x18] sm:$0xff]
        %v487 = vld [vmem:[#allocation4 + $0x20] sm:$0xff]
        %v488 = vld [vmem:[#allocation4 + $0x28] sm:$0xff]
        %v489 = vld [vmem:[#allocation4 + $0x30] sm:$0xff]
        %v490 = vld [vmem:[#allocation4 + $0x38] sm:$0xff]
        %v491 = vld [vmem:[#allocation4 + $0x40] sm:$0xff]
        %v492 = vld [vmem:[#allocation4 + $0x48] sm:$0xff]
        %v493 = vld [vmem:[#allocation4 + $0x50] sm:$0xff]
        %v494 = vld [vmem:[#allocation4 + $0x58] sm:$0xff]
        %v495 = vld [vmem:[#allocation4 + $0x60] sm:$0xff]
        %v496 = vld [vmem:[#allocation4 + $0x68] sm:$0xff]
        %v497 = vld [vmem:[#allocation4 + $0x70] sm:$0xff]
        %v498 = vld [vmem:[#allocation4 + $0x78] sm:$0xff]
        %v499 = vld [vmem:[%s6] sm:$0x1]
        %v501 = vlaneseq
        %v502 = vshrl.u32 %v501, 7
        %v503 = vsub.s32 0, %v502
        %v504 = vrot.slane %v499, %v503
        %506 = vmatprep.subr.mxu0 0.0
        %507 = vmatpush1.msra.mxu0 %v483
        %508 = vmatprep.subr.mxu0 0.0
        %509 = vmatpush1.msra.mxu0 %v484
        %510 = vmatprep.subr.mxu0 0.0
        %511 = vmatpush1.msra.mxu0 %v485
        %512 = vmatprep.subr.mxu0 0.0
        %513 = vmatpush1.msra.mxu0 %v486
        %514 = vmatprep.subr.mxu0 0.0
        %515 = vmatpush1.msra.mxu0 %v487
        %516 = vmatprep.subr.mxu0 0.0
        %517 = vmatpush1.msra.mxu0 %v488
        %518 = vmatprep.subr.mxu0 0.0
        %519 = vmatpush1.msra.mxu0 %v489
        %520 = vmatprep.subr.mxu0 0.0
        %521 = vmatpush1.msra.mxu0 %v490
        %522 = vmatprep.subr.mxu0 0.0
        %523 = vmatpush1.msra.mxu0 %v491
        %524 = vmatprep.subr.mxu0 0.0
        %525 = vmatpush1.msra.mxu0 %v492
        %526 = vmatprep.subr.mxu0 0.0
        %527 = vmatpush1.msra.mxu0 %v493
        %528 = vmatprep.subr.mxu0 0.0
        %529 = vmatpush1.msra.mxu0 %v494
        %530 = vmatprep.subr.mxu0 0.0
        %531 = vmatpush1.msra.mxu0 %v495
        %532 = vmatprep.subr.mxu0 0.0
        %533 = vmatpush1.msra.mxu0 %v496
        %534 = vmatprep.subr.mxu0 0.0
        %535 = vmatpush1.msra.mxu0 %v497
        %536 = vmatprep.subr.mxu0 0.0
        %537 = vmatpush1.msra.mxu0 %v498
        %538 = vmatprep.subr.mxu0 0.0
        %539 = vmatpush1.msra.mxu0 0.0
        %540 = vmatprep.subr.mxu0 0.0
        %541 = vmatpush1.msra.mxu0 0.0
        %542 = vmatprep.subr.mxu0 0.0
        %543 = vmatpush1.msra.mxu0 0.0
        %544 = vmatprep.subr.mxu0 0.0
        %545 = vmatpush1.msra.mxu0 0.0
        %546 = vmatprep.subr.mxu0 0.0
        %547 = vmatpush1.msra.mxu0 0.0
        %548 = vmatprep.subr.mxu0 0.0
        %549 = vmatpush1.msra.mxu0 0.0
        %550 = vmatprep.subr.mxu0 0.0
        %551 = vmatpush1.msra.mxu0 0.0
        %552 = vmatprep.subr.mxu0 0.0
        %553 = vmatpush1.msra.mxu0 0.0
        %554 = vmatprep.subr.mxu0 0.0
        %555 = vmatpush1.msra.mxu0 0.0
        %556 = vmatprep.subr.mxu0 0.0
        %557 = vmatpush1.msra.mxu0 0.0
        %558 = vmatprep.subr.mxu0 0.0
        %559 = vmatpush1.msra.mxu0 0.0
        %560 = vmatprep.subr.mxu0 0.0
        %561 = vmatpush1.msra.mxu0 0.0
        %562 = vmatprep.subr.mxu0 0.0
        %563 = vmatpush1.msra.mxu0 0.0
        %564 = vmatprep.subr.mxu0 0.0
        %565 = vmatpush1.msra.mxu0 0.0
        %566 = vmatprep.subr.mxu0 0.0
        %567 = vmatpush1.msra.mxu0 0.0
        %568 = vmatprep.subr.mxu0 0.0
        %569 = vmatpush1.msra.mxu0 0.0
        %570 = vmatprep.mubr.f32.mxu0 0.0
        %571 = vmatmul.mubr.f32.gmra.mrb[0].mxu0 %v482
        %v572 = vpop.f32.mrb[0].mxu0
        %v573 = vadd.f32 %v504, %v572
        %v574 = vpop.f32.mrb[0].mxu0
        %575 = vdwg.mxu0
        %576 = vst [vmem:[%s303] sm:$0xff] %v573
        %p577 = scmp.lt.s32.totalorder %s20, 7
        %s578 = scalar_select %p577, %s20, 7
        %s579 = smul.addr %s578, 8
        %s580 = scalar_lea.vmem %s7, %s579
        // Predicated region
        $region57: #{_forward.1} parent=47 // pred_check
          %p581 = pneg %p190
        $region58: #{_forward.1} parent=47 // pred_check_branch
          %583 = sbr.rel (%p581) target = $region60
        $region59: #{_forward.1} parent=47 // pred_region
          _
        $region60: #{_forward.1} parent=47 // pred_fallthru
          _
      $region48: #{_forward.1} parent=5 // pred_fallthru
        _
      %p584 = scmp.le.s32.totalorder 2, %s15
      // Predicated region
      $region61: #{_forward.1} parent=5 // pred_check
        %p585 = pneg %p584
      $region62: #{_forward.1} parent=5 // pred_check_branch
        %587 = sbr.rel (%p585) target = $region64
      $region63: #{_forward.1} parent=5 // pred_region
        %s588 = ssub.s32 %s15, 2
        // Predicated region
        $region65: #{_forward.1} parent=63 // pred_check
          %p589 = pneg %p196
        $region66: #{_forward.1} parent=63 // pred_check_branch
          %591 = sbr.rel (%p589) target = $region68
        $region67: #{_forward.1} parent=63 // pred_region
          %p592 = scmp.lt.s32.totalorder %s21, 7
          %s593 = scalar_select %p592, %s21, 7
          %s594 = smul.addr %s593, 8
          %s595 = scalar_lea.vmem %s7, %s594
        $region68: #{_forward.1} parent=63 // pred_fallthru
          _
      $region64: #{_forward.1} parent=5 // pred_fallthru
        _
    $region6: #{_forward.1} parent=1 // loop_footer
      %s19 = sadd.s32 1, %s15
    $region7: #{_forward.1} parent=1 // loop_footer_branch
      %14 = sbr.rel target = $region3
    $region8: #{_forward.1} parent=1 // loop_exit
      _
    %596 = vsyncpa [#allocation3], 1
    %s597 = scalar_lea.sflag [#allocation3], 1
    %598 = vsyncpa %s597, 1
    %599 = vsyncpa [#allocation5], 1

</llo_original>
